<compile_context>
chip_gen: v7x
topology: tpu7x:2x2x1
jax: 0.10.0
libtpu: 0.0.40
codegen_flags: <defaults>
</compile_context>

<pallas_src>
from functools import partial

import jax
import jax.numpy as jnp
import numpy as np
from jax import lax
from jax.experimental import pallas as pl
from jax.experimental.pallas import tpu as pltpu

EPS_LN = 1e-5   # torch.nn.LayerNorm default
EPS_BN = 1e-5   # torch.nn.BatchNorm2d default

# (m, k) x (n, k) -> (m, n): contract the minor dims of both operands (NT matmul).
_NT_2D = (((1,), (1,)), ((), ()))


# ----------------------------- kernel helpers ------------------------------
def _softmax_lastdim(x):
    m = jnp.max(x, axis=-1, keepdims=True)
    e = jnp.exp(x - m)
    return e / jnp.sum(e, axis=-1, keepdims=True)        # exact divide (parity)


def _layernorm(x, gamma, beta):
    # one-pass variance: mean(x^2) - mu^2 (single read of the slab)
    mu = jnp.mean(x, axis=-1, keepdims=True)
    ms = jnp.mean(x * x, axis=-1, keepdims=True)
    var = ms - mu * mu
    return (x - mu) * lax.rsqrt(var + EPS_LN) * gamma + beta


# --------------------------------- kernel ----------------------------------
def adapter_kernel(gav_ref,    # SMEM f32[1]       gate_av
                   x_ref,      # VMEM (B, C, N)    NCHW-squeezed activations
                   vis_ref,    # VMEM (B, C, Tv)   NCHW-squeezed visual tokens
                   tok_ref,    # VMEM (T, C)       my_tokens (f32)
                   wd_ref,     # VMEM (C, D)       block-diag down weight * bn1 scale
                   b1_ref,     # VMEM (1, D)       folded bn1 bias
                   wu_ref,     # VMEM (D, C)       block-diag up weight * bn2 scale
                   b2_ref,     # VMEM (1, C)       folded bn2 bias
                   lnb_ref,    # VMEM (2, C)       ln_before [w, b]
                   lnp_ref,    # VMEM (2, C)       ln_post   [gate*w, gate*b]
                   out_ref,    # VMEM (B*N, C)     channels-last, lane-dense output
                   h_ref,      # VMEM scratch (B*N, C) f32
                   *, dot_dtype):
    batch, _, n_sp = x_ref.shape
    gate_av = gav_ref[0]

    tok = tok_ref[...].astype(jnp.float32)                # (T, C)
    tok_c = tok.astype(dot_dtype)

    # Static unroll over the (small) batch: everything below is plain 2-D MXU
    # matmuls (NN / NT), no broadcast materialization, no batched 3-D dots.
    for b in range(batch):
        vis_c = vis_ref[b].astype(dot_dtype)              # (C, Tv)

        # ---- token <- vis cross attention ----
        s_tv = jnp.dot(tok_c, vis_c,
                       preferred_element_type=jnp.float32)                 # (T, Tv)
        a_tv = _softmax_lastdim(s_tv)
        rep = tok + lax.dot_general(a_tv.astype(dot_dtype), vis_c, _NT_2D,
                                    preferred_element_type=jnp.float32)    # (T, C)
        rep_c = rep.astype(dot_dtype)

        # ---- x <- token cross attention (channels-last; the only full-activation
        #      transpose, done on VMEM data) ----
        x_cl = x_ref[b].astype(jnp.float32).T                              # (N, C)
        s_nt = lax.dot_general(x_cl.astype(dot_dtype), rep_c, _NT_2D,
                               preferred_element_type=jnp.float32)         # (N, T)
        a_nt = _softmax_lastdim(s_nt)
        x_res = jnp.dot(a_nt.astype(dot_dtype), rep_c,
                        preferred_element_type=jnp.float32)                # (N, C)

        h_ref[b * n_sp:(b + 1) * n_sp, :] = x_cl + gate_av * x_res

    # ---- bottleneck on the batch-folded (B*N, C) slab:
    #      LN -> (down ⊙ bn1) -> ReLU -> (up ⊙ bn2) -> (gate ⊙ ln_post)
    h = _layernorm(h_ref[...], lnb_ref[0, :], lnb_ref[1, :])
    z = jnp.dot(h.astype(dot_dtype), wd_ref[...],
                preferred_element_type=jnp.float32) + b1_ref[0, :]
    z = jnp.maximum(z, 0.0)
    o = jnp.dot(z.astype(dot_dtype), wu_ref[...],
                preferred_element_type=jnp.float32) + b2_ref[0, :]
    o = _layernorm(o, lnp_ref[0, :], lnp_ref[1, :])       # output gate already folded

    # Lane-dense, channels-last store — no output transpose inside the kernel.
    out_ref[...] = o.astype(out_ref.dtype)


# ------------------------------- glue / wrapper -----------------------------
def block_diag_from_conv(w, groups):
    """Conv2d(groups=G, kernel=1) weight (out, in//G[,1,1]) -> dense (in, out)."""
    w = w.reshape(w.shape[0], -1)
    out_dim, in_per = w.shape
    og = out_dim // groups
    in_dim = in_per * groups
    W = jnp.zeros((in_dim, out_dim), w.dtype)
    for g in range(groups):
        W = W.at[g * in_per:(g + 1) * in_per, g * og:(g + 1) * og].set(
            w[g * og:(g + 1) * og].T)
    return W


@partial(jax.jit, static_argnames=("dot_dtype",))
def visual_adapter_forward(x_nchw, vis_nchw, my_tokens, Wdown_dense, Wup_dense,
                           bn1, bn2, lnb, lnp_, gate_av, gate, *,
                           dot_dtype=jnp.bfloat16):
    B, C, N, _ = x_nchw.shape
    Tv = vis_nchw.shape[2]
    T = my_tokens.shape[0]
    D = Wdown_dense.shape[1]

    # Fold eval-mode BatchNorms into the block-diagonal conv weights and the output
    # gate into ln_post (exact f32 algebra; done before the bf16 weight cast).
    s1 = bn1[0] * lax.rsqrt(bn1[3] + EPS_BN)
    b1 = (bn1[1] - bn1[2] * s1)[None, :]                   # (1, D)  f32
    s2 = bn2[0] * lax.rsqrt(bn2[3] + EPS_BN)
    b2 = (bn2[1] - bn2[2] * s2)[None, :]                   # (1, C)  f32
    Wd = (Wdown_dense * s1[None, :]).astype(dot_dtype)     # (C, D)
    Wu = (Wup_dense * s2[None, :]).astype(dot_dtype)       # (D, C)
    lnp_fused = lnp_ * gate                                # (2, C)  f32

    # NCHW (B, C, N, 1) -> (B, C, N): free squeeze, no wrapper-side transposes of
    # the inputs (the single activation transpose happens in VMEM inside the kernel).
    x_cf = x_nchw[..., 0]
    vis_cf = vis_nchw[..., 0]
    gav = jnp.reshape(gate_av, (1,)).astype(jnp.float32)

    esize = np.dtype(x_nchw.dtype).itemsize
    wsize = np.dtype(dot_dtype).itemsize
    cost = pl.CostEstimate(
        flops=2 * B * (2 * T * C * Tv + 2 * N * T * C + 2 * N * C * D),
        transcendentals=B * (T * Tv + N * T),
        bytes_accessed=(2 * B * C * N + B * C * Tv) * esize
                       + (C * D + D * C) * wsize
                       + (T * C + D + 5 * C + 1) * 4,
    )

    vmem = pl.BlockSpec(memory_space=pltpu.MemorySpace.VMEM)
    smem = pl.BlockSpec(memory_space=pltpu.MemorySpace.SMEM)

    # Grid-free call: whole (small) operands resident in VMEM, no pipelining /
    # double-buffering overhead.  For large-batch v7x deployments a core-parallel
    # batch axis (pltpu.CORE_PARALLEL / pl.core_map) could split work across the
    # two TensorCores.
    out_cl = pl.pallas_call(
        partial(adapter_kernel, dot_dtype=dot_dtype),
        out_shape=jax.ShapeDtypeStruct((B * N, C), x_nchw.dtype),
        in_specs=[smem, vmem, vmem, vmem, vmem, vmem, vmem, vmem, vmem, vmem],
        out_specs=vmem,
        scratch_shapes=[pltpu.VMEM((B * N, C), jnp.float32)],
        cost_estimate=cost,
    )(gav, x_cf, vis_cf, my_tokens, Wd, b1, Wu, b2, lnb, lnp_fused)

    # Restore the module's NCHW (B, C, N, 1) output for parity with PyTorch; a
    # channels-last consumer would take `out_cl` directly and skip this transpose.
    return jnp.transpose(out_cl.reshape(B, N, C), (0, 2, 1))[..., None]


# ---------------------------- pure-JAX reference ----------------------------
def reference_forward(x_nchw, vis_nchw, my_tokens, Wdown_dense, Wup_dense,
                      bn1, bn2, lnb, lnp_, gate_av, gate, dot_dtype=jnp.float32):
    """PyTorch-order reference (eval-mode BN).  dot_dtype casts matmul operands
    (f32 -> exact module semantics; bf16 -> numerics-matched to the fast path)."""
    def mm(eq, a, b):
        return jnp.einsum(eq, a.astype(dot_dtype), b.astype(dot_dtype),
                          preferred_element_type=jnp.float32)

    x = jnp.transpose(x_nchw[..., 0], (0, 2, 1))      # (B, N, C)
    vis = jnp.transpose(vis_nchw[..., 0], (0, 2, 1))  # (B, Tv, C)
    B = x.shape[0]

    tok = jnp.broadcast_to(my_tokens[None], (B,) + my_tokens.shape)
    att = jax.nn.softmax(mm('btc,bvc->btv', tok, vis), axis=-1)
    rep = tok + mm('btv,bvc->btc', att, vis)
    att2 = jax.nn.softmax(mm('bnc,btc->bnt', x, rep), axis=-1)
    x = x + gate_av * mm('bnt,btc->bnc', att2, rep)

    def ln(v, w, b):
        mu = jnp.mean(v, -1, keepdims=True)
        var = jnp.mean((v - mu) ** 2, -1, keepdims=True)
        return (v - mu) / jnp.sqrt(var + EPS_LN) * w + b

    def bn(v, p):
        return (v - p[2]) / jnp.sqrt(p[3] + EPS_BN) * p[0] + p[1]

    x = ln(x, lnb[0], lnb[1])
    z = jnp.maximum(bn(mm('bnc,cd->bnd', x, Wdown_dense), bn1), 0.0)
    o = bn(mm('bnd,dc->bnc', z, Wup_dense), bn2)
    o = gate * ln(o, lnp_[0], lnp_[1])
    return jnp.transpose(o, (0, 2, 1))[..., None]


# ----------------------------------- main -----------------------------------
if __name__ == "__main__":
    # Shapes consistent with the module's forward:
    #   x         : (B, C, N, 1)  NCHW, spatial width 1
    #   vis_token : (B, C, Tv, 1)
    B, C, N, Tv = 2, 32, 16, 8        # input_dim = output_dim = 32
    num_tokens = 4                    # opt.num_tokens
    groups = 2                        # opt.num_conv_group
    reduction_factor = 4
    D = C // reduction_factor         # down_sample_size = 8

    key = jax.random.PRNGKey(0)
    ks = jax.random.split(key, 12)

    x_nchw = jax.random.normal(ks[0], (B, C, N, 1), jnp.float32)
    vis_nchw = jax.random.normal(ks[1], (B, C, Tv, 1), jnp.float32)

    # Parameters (synthetic; __init__ shapes respected).  Torch inits gate /
    # gate_av / my_tokens to zero; small non-zero values are used here so the
    # whole compute path is actually exercised.
    my_tokens = 0.1 * jax.random.normal(ks[2], (num_tokens, C), jnp.float32)
    gate_av = jnp.array(0.5, jnp.float32)
    gate = jnp.array(0.7, jnp.float32)
    w_down_conv = 0.2 * jax.random.normal(ks[3], (D, C // groups), jnp.float32)
    w_up_conv = 0.2 * jax.random.normal(ks[4], (C, D // groups), jnp.float32)
    Wdown_dense = block_diag_from_conv(w_down_conv, groups)   # (C, D)
    Wup_dense = block_diag_from_conv(w_up_conv, groups)       # (D, C)

    # BatchNorm (eval-mode) params: rows = [gamma, beta, running_mean, running_var]
    bn1 = jnp.stack([1.0 + 0.1 * jax.random.normal(ks[5], (D,)),
                     0.1 * jax.random.normal(ks[6], (D,)),
                     jnp.zeros((D,)), jnp.ones((D,))]).astype(jnp.float32)
    bn2 = jnp.stack([1.0 + 0.1 * jax.random.normal(ks[7], (C,)),
                     0.1 * jax.random.normal(ks[8], (C,)),
                     jnp.zeros((C,)), jnp.ones((C,))]).astype(jnp.float32)
    # LayerNorm params: rows = [weight, bias]
    lnb = jnp.stack([1.0 + 0.1 * jax.random.normal(ks[9], (C,)),
                     0.1 * jax.random.normal(ks[10], (C,))]).astype(jnp.float32)
    lnp_ = jnp.stack([1.0 + 0.1 * jax.random.normal(ks[11], (C,)),
                      jnp.zeros((C,))]).astype(jnp.float32)

    args = (x_nchw, vis_nchw, my_tokens, Wdown_dense, Wup_dense,
            bn1, bn2, lnb, lnp_, gate_av, gate)

    # Fast path: bf16 MXU operands, f32 accumulation / elementwise math.
    out = visual_adapter_forward(*args, dot_dtype=jnp.bfloat16)
    out = jax.block_until_ready(out)
    assert out.shape == (B, C, N, 1)

    # 1) Numerics check against a reference with identically bf16-cast matmul
    #    operands (same module op order, eval-mode BN): isolates Pallas-vs-XLA
    #    differences (accumulation order, fused BN/gate algebra, transcendentals).
    ref_matched = reference_forward(*args, dot_dtype=jnp.bfloat16)
    np.testing.assert_allclose(np.asarray(out), np.asarray(ref_matched),
                               rtol=2e-2, atol=2e-2)

    # 2) Semantic sanity against the pure-f32 module reference; tolerance covers the
    #    bf16 matmul-operand rounding of the fast path.
    ref_f32 = reference_forward(*args, dot_dtype=jnp.float32)
    np.testing.assert_allclose(np.asarray(out), np.asarray(ref_f32),
                               rtol=6e-2, atol=6e-2)

    print("KERNEL_OK")
</pallas_src>

<mosaic_0001>
module attributes {stable_mosaic.version = 11 : i64} {
  func.func @adapter_kernel(%arg0: memref<1xf32, #tpu.memory_space<smem>>, %arg1: memref<2x32x16xf32, #tpu.memory_space<vmem>>, %arg2: memref<2x32x8xf32, #tpu.memory_space<vmem>>, %arg3: memref<4x32xf32, #tpu.memory_space<vmem>>, %arg4: memref<32x8xbf16, #tpu.memory_space<vmem>>, %arg5: memref<1x8xf32, #tpu.memory_space<vmem>>, %arg6: memref<8x32xbf16, #tpu.memory_space<vmem>>, %arg7: memref<1x32xf32, #tpu.memory_space<vmem>>, %arg8: memref<2x32xf32, #tpu.memory_space<vmem>>, %arg9: memref<2x32xf32, #tpu.memory_space<vmem>>, %arg10: memref<32x32xf32, #tpu.memory_space<vmem>>, %arg11: memref<32x32xf32, #tpu.memory_space<vmem>>) attributes {dimension_semantics = [], scalar_prefetch = 0 : i64, scratch_operands = 1 : i64, tpu.core_type = #tpu.core_type<tc>} {
    %c0 = arith.constant 0 : index
    %0 = memref.load %arg0[%c0] : memref<1xf32, #tpu.memory_space<smem>>
    %c0_0 = arith.constant 0 : index
    %c0_1 = arith.constant 0 : index
    %1 = vector.load %arg3[%c0_0, %c0_1] : memref<4x32xf32, #tpu.memory_space<vmem>>, vector<4x32xf32>
    %2 = arith.truncf %1 : vector<4x32xf32> to vector<4x32xbf16>
    %c0_2 = arith.constant 0 : index
    %c0_3 = arith.constant 0 : index
    %c0_4 = arith.constant 0 : index
    %3 = vector.load %arg2[%c0_2, %c0_3, %c0_4] : memref<2x32x8xf32, #tpu.memory_space<vmem>>, vector<1x32x8xf32>
    %4 = vector.shape_cast %3 : vector<1x32x8xf32> to vector<32x8xf32>
    %5 = arith.truncf %4 : vector<32x8xf32> to vector<32x8xbf16>
    %cst = arith.constant dense<0.000000e+00> : vector<4x8xf32>
    %6 = tpu.matmul %2, %5, %cst {dimension_numbers = #tpu.dot_dimension_numbers<[1], [0], [0], [1], [0, 0, 1, 1], [], []>} : vector<4x32xbf16>, vector<32x8xbf16>, vector<4x8xf32> -> vector<4x8xf32>
    %cst_5 = arith.constant dense<0xFF800000> : vector<4xf32>
    %7 = vector.multi_reduction <maximumf>, %6, %cst_5 [1] : vector<4x8xf32> to vector<4xf32>
    %8 = vector.shape_cast %7 : vector<4xf32> to vector<4x1xf32>
    %9 = vector.broadcast %8 : vector<4x1xf32> to vector<4x8xf32>
    %10 = arith.subf %6, %9 : vector<4x8xf32>
    %11 = math.exp %10 : vector<4x8xf32>
    %cst_6 = arith.constant dense<0.000000e+00> : vector<4xf32>
    %12 = vector.multi_reduction <add>, %11, %cst_6 [1] : vector<4x8xf32> to vector<4xf32>
    %13 = vector.shape_cast %12 : vector<4xf32> to vector<4x1xf32>
    %14 = vector.broadcast %13 : vector<4x1xf32> to vector<4x8xf32>
    %15 = arith.divf %11, %14 : vector<4x8xf32>
    %16 = arith.truncf %15 : vector<4x8xf32> to vector<4x8xbf16>
    %cst_7 = arith.constant dense<0.000000e+00> : vector<4x32xf32>
    %17 = tpu.matmul %16, %5, %cst_7 {dimension_numbers = #tpu.dot_dimension_numbers<[1], [1], [0], [0], [0, 0, 1, 0], [], []>} : vector<4x8xbf16>, vector<32x8xbf16>, vector<4x32xf32> -> vector<4x32xf32>
    %18 = arith.addf %1, %17 : vector<4x32xf32>
    %19 = arith.truncf %18 : vector<4x32xf32> to vector<4x32xbf16>
    %c0_8 = arith.constant 0 : index
    %c0_9 = arith.constant 0 : index
    %c0_10 = arith.constant 0 : index
    %20 = vector.load %arg1[%c0_8, %c0_9, %c0_10] : memref<2x32x16xf32, #tpu.memory_space<vmem>>, vector<1x32x16xf32>
    %21 = vector.shape_cast %20 : vector<1x32x16xf32> to vector<32x16xf32>
    %22 = tpu.transpose %21, [1, 0] : vector<32x16xf32> -> vector<16x32xf32>
    %23 = arith.truncf %22 : vector<16x32xf32> to vector<16x32xbf16>
    %cst_11 = arith.constant dense<0.000000e+00> : vector<16x4xf32>
    %24 = tpu.matmul %23, %19, %cst_11 {dimension_numbers = #tpu.dot_dimension_numbers<[1], [1], [0], [0], [0, 0, 1, 0], [], []>} : vector<16x32xbf16>, vector<4x32xbf16>, vector<16x4xf32> -> vector<16x4xf32>
    %cst_12 = arith.constant dense<0xFF800000> : vector<16xf32>
    %25 = vector.multi_reduction <maximumf>, %24, %cst_12 [1] : vector<16x4xf32> to vector<16xf32>
    %26 = vector.shape_cast %25 : vector<16xf32> to vector<16x1xf32>
    %27 = vector.broadcast %26 : vector<16x1xf32> to vector<16x4xf32>
    %28 = arith.subf %24, %27 : vector<16x4xf32>
    %29 = math.exp %28 : vector<16x4xf32>
    %cst_13 = arith.constant dense<0.000000e+00> : vector<16xf32>
    %30 = vector.multi_reduction <add>, %29, %cst_13 [1] : vector<16x4xf32> to vector<16xf32>
    %31 = vector.shape_cast %30 : vector<16xf32> to vector<16x1xf32>
    %32 = vector.broadcast %31 : vector<16x1xf32> to vector<16x4xf32>
    %33 = arith.divf %29, %32 : vector<16x4xf32>
    %34 = arith.truncf %33 : vector<16x4xf32> to vector<16x4xbf16>
    %cst_14 = arith.constant dense<0.000000e+00> : vector<16x32xf32>
    %35 = tpu.matmul %34, %19, %cst_14 {dimension_numbers = #tpu.dot_dimension_numbers<[1], [0], [0], [1], [0, 0, 1, 1], [], []>} : vector<16x4xbf16>, vector<4x32xbf16>, vector<16x32xf32> -> vector<16x32xf32>
    %36 = vector.broadcast %0 : f32 to vector<16x32xf32>
    %37 = arith.mulf %36, %35 : vector<16x32xf32>
    %38 = arith.addf %22, %37 : vector<16x32xf32>
    %c0_15 = arith.constant 0 : index
    %c0_16 = arith.constant 0 : index
    %39 = vector.load %arg11[%c0_15, %c0_16] : memref<32x32xf32, #tpu.memory_space<vmem>>, vector<16x32xf32>
    tpu.vector_store %arg11[%c0_15, %c0_16], %38 {strides = array<i32>} : memref<32x32xf32, #tpu.memory_space<vmem>>, vector<16x32xf32>,
    %c1 = arith.constant 1 : index
    %c0_17 = arith.constant 0 : index
    %c0_18 = arith.constant 0 : index
    %40 = vector.load %arg2[%c1, %c0_17, %c0_18] : memref<2x32x8xf32, #tpu.memory_space<vmem>>, vector<1x32x8xf32>
    %41 = vector.shape_cast %40 : vector<1x32x8xf32> to vector<32x8xf32>
    %42 = arith.truncf %41 : vector<32x8xf32> to vector<32x8xbf16>
    %cst_19 = arith.constant dense<0.000000e+00> : vector<4x8xf32>
    %43 = tpu.matmul %2, %42, %cst_19 {dimension_numbers = #tpu.dot_dimension_numbers<[1], [0], [0], [1], [0, 0, 1, 1], [], []>} : vector<4x32xbf16>, vector<32x8xbf16>, vector<4x8xf32> -> vector<4x8xf32>
    %cst_20 = arith.constant dense<0xFF800000> : vector<4xf32>
    %44 = vector.multi_reduction <maximumf>, %43, %cst_20 [1] : vector<4x8xf32> to vector<4xf32>
    %45 = vector.shape_cast %44 : vector<4xf32> to vector<4x1xf32>
    %46 = vector.broadcast %45 : vector<4x1xf32> to vector<4x8xf32>
    %47 = arith.subf %43, %46 : vector<4x8xf32>
    %48 = math.exp %47 : vector<4x8xf32>
    %cst_21 = arith.constant dense<0.000000e+00> : vector<4xf32>
    %49 = vector.multi_reduction <add>, %48, %cst_21 [1] : vector<4x8xf32> to vector<4xf32>
    %50 = vector.shape_cast %49 : vector<4xf32> to vector<4x1xf32>
    %51 = vector.broadcast %50 : vector<4x1xf32> to vector<4x8xf32>
    %52 = arith.divf %48, %51 : vector<4x8xf32>
    %53 = arith.truncf %52 : vector<4x8xf32> to vector<4x8xbf16>
    %cst_22 = arith.constant dense<0.000000e+00> : vector<4x32xf32>
    %54 = tpu.matmul %53, %42, %cst_22 {dimension_numbers = #tpu.dot_dimension_numbers<[1], [1], [0], [0], [0, 0, 1, 0], [], []>} : vector<4x8xbf16>, vector<32x8xbf16>, vector<4x32xf32> -> vector<4x32xf32>
    %55 = arith.addf %1, %54 : vector<4x32xf32>
    %56 = arith.truncf %55 : vector<4x32xf32> to vector<4x32xbf16>
    %c1_23 = arith.constant 1 : index
    %c0_24 = arith.constant 0 : index
    %c0_25 = arith.constant 0 : index
    %57 = vector.load %arg1[%c1_23, %c0_24, %c0_25] : memref<2x32x16xf32, #tpu.memory_space<vmem>>, vector<1x32x16xf32>
    %58 = vector.shape_cast %57 : vector<1x32x16xf32> to vector<32x16xf32>
    %59 = tpu.transpose %58, [1, 0] : vector<32x16xf32> -> vector<16x32xf32>
    %60 = arith.truncf %59 : vector<16x32xf32> to vector<16x32xbf16>
    %cst_26 = arith.constant dense<0.000000e+00> : vector<16x4xf32>
    %61 = tpu.matmul %60, %56, %cst_26 {dimension_numbers = #tpu.dot_dimension_numbers<[1], [1], [0], [0], [0, 0, 1, 0], [], []>} : vector<16x32xbf16>, vector<4x32xbf16>, vector<16x4xf32> -> vector<16x4xf32>
    %cst_27 = arith.constant dense<0xFF800000> : vector<16xf32>
    %62 = vector.multi_reduction <maximumf>, %61, %cst_27 [1] : vector<16x4xf32> to vector<16xf32>
    %63 = vector.shape_cast %62 : vector<16xf32> to vector<16x1xf32>
    %64 = vector.broadcast %63 : vector<16x1xf32> to vector<16x4xf32>
    %65 = arith.subf %61, %64 : vector<16x4xf32>
    %66 = math.exp %65 : vector<16x4xf32>
    %cst_28 = arith.constant dense<0.000000e+00> : vector<16xf32>
    %67 = vector.multi_reduction <add>, %66, %cst_28 [1] : vector<16x4xf32> to vector<16xf32>
    %68 = vector.shape_cast %67 : vector<16xf32> to vector<16x1xf32>
    %69 = vector.broadcast %68 : vector<16x1xf32> to vector<16x4xf32>
    %70 = arith.divf %66, %69 : vector<16x4xf32>
    %71 = arith.truncf %70 : vector<16x4xf32> to vector<16x4xbf16>
    %cst_29 = arith.constant dense<0.000000e+00> : vector<16x32xf32>
    %72 = tpu.matmul %71, %56, %cst_29 {dimension_numbers = #tpu.dot_dimension_numbers<[1], [0], [0], [1], [0, 0, 1, 1], [], []>} : vector<16x4xbf16>, vector<4x32xbf16>, vector<16x32xf32> -> vector<16x32xf32>
    %73 = vector.broadcast %0 : f32 to vector<16x32xf32>
    %74 = arith.mulf %73, %72 : vector<16x32xf32>
    %75 = arith.addf %59, %74 : vector<16x32xf32>
    %c16 = arith.constant 16 : index
    %c0_30 = arith.constant 0 : index
    %76 = vector.load %arg11[%c16, %c0_30] : memref<32x32xf32, #tpu.memory_space<vmem>>, vector<16x32xf32>
    tpu.vector_store %arg11[%c16, %c0_30], %75 {strides = array<i32>} : memref<32x32xf32, #tpu.memory_space<vmem>>, vector<16x32xf32>,
    %c0_31 = arith.constant 0 : index
    %c0_32 = arith.constant 0 : index
    %77 = vector.load %arg11[%c0_31, %c0_32] : memref<32x32xf32, #tpu.memory_space<vmem>>, vector<32x32xf32>
    %c0_33 = arith.constant 0 : index
    %c0_34 = arith.constant 0 : index
    %78 = vector.load %arg8[%c0_33, %c0_34] : memref<2x32xf32, #tpu.memory_space<vmem>>, vector<1x32xf32>
    %79 = vector.shape_cast %78 : vector<1x32xf32> to vector<32xf32>
    %c1_35 = arith.constant 1 : index
    %c0_36 = arith.constant 0 : index
    %80 = vector.load %arg8[%c1_35, %c0_36] : memref<2x32xf32, #tpu.memory_space<vmem>>, vector<1x32xf32>
    %81 = vector.shape_cast %80 : vector<1x32xf32> to vector<32xf32>
    %cst_37 = arith.constant dense<0.000000e+00> : vector<32xf32>
    %82 = vector.multi_reduction <add>, %77, %cst_37 [1] : vector<32x32xf32> to vector<32xf32>
    %83 = vector.shape_cast %82 : vector<32xf32> to vector<32x1xf32>
    %cst_38 = arith.constant 3.200000e+01 : f32
    %84 = vector.broadcast %cst_38 : f32 to vector<32x1xf32>
    %85 = arith.divf %83, %84 : vector<32x1xf32>
    %86 = arith.mulf %77, %77 : vector<32x32xf32>
    %cst_39 = arith.constant dense<0.000000e+00> : vector<32xf32>
    %87 = vector.multi_reduction <add>, %86, %cst_39 [1] : vector<32x32xf32> to vector<32xf32>
    %88 = vector.shape_cast %87 : vector<32xf32> to vector<32x1xf32>
    %cst_40 = arith.constant 3.200000e+01 : f32
    %89 = vector.broadcast %cst_40 : f32 to vector<32x1xf32>
    %90 = arith.divf %88, %89 : vector<32x1xf32>
    %91 = arith.mulf %85, %85 : vector<32x1xf32>
    %92 = arith.subf %90, %91 : vector<32x1xf32>
    %93 = vector.broadcast %85 : vector<32x1xf32> to vector<32x32xf32>
    %94 = arith.subf %77, %93 : vector<32x32xf32>
    %cst_41 = arith.constant 9.99999974E-6 : f32
    %95 = vector.broadcast %cst_41 : f32 to vector<32x1xf32>
    %96 = arith.addf %92, %95 : vector<32x1xf32>
    %97 = math.rsqrt %96 : vector<32x1xf32>
    %98 = vector.broadcast %97 : vector<32x1xf32> to vector<32x32xf32>
    %99 = arith.mulf %94, %98 : vector<32x32xf32>
    %100 = vector.shape_cast %79 : vector<32xf32> to vector<1x32xf32>
    %101 = vector.broadcast %100 : vector<1x32xf32> to vector<32x32xf32>
    %102 = arith.mulf %99, %101 : vector<32x32xf32>
    %103 = vector.shape_cast %81 : vector<32xf32> to vector<1x32xf32>
    %104 = vector.broadcast %103 : vector<1x32xf32> to vector<32x32xf32>
    %105 = arith.addf %102, %104 : vector<32x32xf32>
    %106 = arith.truncf %105 : vector<32x32xf32> to vector<32x32xbf16>
    %c0_42 = arith.constant 0 : index
    %c0_43 = arith.constant 0 : index
    %107 = vector.load %arg4[%c0_42, %c0_43] : memref<32x8xbf16, #tpu.memory_space<vmem>>, vector<32x8xbf16>
    %cst_44 = arith.constant dense<0.000000e+00> : vector<32x8xf32>
    %108 = tpu.matmul %106, %107, %cst_44 {dimension_numbers = #tpu.dot_dimension_numbers<[1], [0], [0], [1], [0, 0, 1, 1], [], []>} : vector<32x32xbf16>, vector<32x8xbf16>, vector<32x8xf32> -> vector<32x8xf32>
    %c0_45 = arith.constant 0 : index
    %c0_46 = arith.constant 0 : index
    %109 = vector.load %arg5[%c0_45, %c0_46] : memref<1x8xf32, #tpu.memory_space<vmem>>, vector<1x8xf32>
    %110 = vector.shape_cast %109 : vector<1x8xf32> to vector<8xf32>
    %111 = vector.shape_cast %110 : vector<8xf32> to vector<1x8xf32>
    %112 = vector.broadcast %111 : vector<1x8xf32> to vector<32x8xf32>
    %113 = arith.addf %108, %112 : vector<32x8xf32>
    %cst_47 = arith.constant 0.000000e+00 : f32
    %114 = vector.broadcast %cst_47 : f32 to vector<32x8xf32>
    %115 = arith.maximumf %113, %114 : vector<32x8xf32>
    %116 = arith.truncf %115 : vector<32x8xf32> to vector<32x8xbf16>
    %c0_48 = arith.constant 0 : index
    %c0_49 = arith.constant 0 : index
    %117 = vector.load %arg6[%c0_48, %c0_49] : memref<8x32xbf16, #tpu.memory_space<vmem>>, vector<8x32xbf16>
    %cst_50 = arith.constant dense<0.000000e+00> : vector<32x32xf32>
    %118 = tpu.matmul %116, %117, %cst_50 {dimension_numbers = #tpu.dot_dimension_numbers<[1], [0], [0], [1], [0, 0, 1, 1], [], []>} : vector<32x8xbf16>, vector<8x32xbf16>, vector<32x32xf32> -> vector<32x32xf32>
    %c0_51 = arith.constant 0 : index
    %c0_52 = arith.constant 0 : index
    %119 = vector.load %arg7[%c0_51, %c0_52] : memref<1x32xf32, #tpu.memory_space<vmem>>, vector<1x32xf32>
    %120 = vector.shape_cast %119 : vector<1x32xf32> to vector<32xf32>
    %121 = vector.shape_cast %120 : vector<32xf32> to vector<1x32xf32>
    %122 = vector.broadcast %121 : vector<1x32xf32> to vector<32x32xf32>
    %123 = arith.addf %118, %122 : vector<32x32xf32>
    %c0_53 = arith.constant 0 : index
    %c0_54 = arith.constant 0 : index
    %124 = vector.load %arg9[%c0_53, %c0_54] : memref<2x32xf32, #tpu.memory_space<vmem>>, vector<1x32xf32>
    %125 = vector.shape_cast %124 : vector<1x32xf32> to vector<32xf32>
    %c1_55 = arith.constant 1 : index
    %c0_56 = arith.constant 0 : index
    %126 = vector.load %arg9[%c1_55, %c0_56] : memref<2x32xf32, #tpu.memory_space<vmem>>, vector<1x32xf32>
    %127 = vector.shape_cast %126 : vector<1x32xf32> to vector<32xf32>
    %cst_57 = arith.constant dense<0.000000e+00> : vector<32xf32>
    %128 = vector.multi_reduction <add>, %123, %cst_57 [1] : vector<32x32xf32> to vector<32xf32>
    %129 = vector.shape_cast %128 : vector<32xf32> to vector<32x1xf32>
    %cst_58 = arith.constant 3.200000e+01 : f32
    %130 = vector.broadcast %cst_58 : f32 to vector<32x1xf32>
    %131 = arith.divf %129, %130 : vector<32x1xf32>
    %132 = arith.mulf %123, %123 : vector<32x32xf32>
    %cst_59 = arith.constant dense<0.000000e+00> : vector<32xf32>
    %133 = vector.multi_reduction <add>, %132, %cst_59 [1] : vector<32x32xf32> to vector<32xf32>
    %134 = vector.shape_cast %133 : vector<32xf32> to vector<32x1xf32>
    %cst_60 = arith.constant 3.200000e+01 : f32
    %135 = vector.broadcast %cst_60 : f32 to vector<32x1xf32>
    %136 = arith.divf %134, %135 : vector<32x1xf32>
    %137 = arith.mulf %131, %131 : vector<32x1xf32>
    %138 = arith.subf %136, %137 : vector<32x1xf32>
    %139 = vector.broadcast %131 : vector<32x1xf32> to vector<32x32xf32>
    %140 = arith.subf %123, %139 : vector<32x32xf32>
    %cst_61 = arith.constant 9.99999974E-6 : f32
    %141 = vector.broadcast %cst_61 : f32 to vector<32x1xf32>
    %142 = arith.addf %138, %141 : vector<32x1xf32>
    %143 = math.rsqrt %142 : vector<32x1xf32>
    %144 = vector.broadcast %143 : vector<32x1xf32> to vector<32x32xf32>
    %145 = arith.mulf %140, %144 : vector<32x32xf32>
    %146 = vector.shape_cast %125 : vector<32xf32> to vector<1x32xf32>
    %147 = vector.broadcast %146 : vector<1x32xf32> to vector<32x32xf32>
    %148 = arith.mulf %145, %147 : vector<32x32xf32>
    %149 = vector.shape_cast %127 : vector<32xf32> to vector<1x32xf32>
    %150 = vector.broadcast %149 : vector<1x32xf32> to vector<32x32xf32>
    %151 = arith.addf %148, %150 : vector<32x32xf32>
    %c0_62 = arith.constant 0 : index
    %c0_63 = arith.constant 0 : index
    %152 = vector.load %arg10[%c0_62, %c0_63] : memref<32x32xf32, #tpu.memory_space<vmem>>, vector<32x32xf32>
    tpu.vector_store %arg10[%c0_62, %c0_63], %151 {strides = array<i32>} : memref<32x32xf32, #tpu.memory_space<vmem>>, vector<32x32xf32>,
    return
  }
}

</mosaic_0001>

<llo_original>
// kernel: visual_adapter_forward.1
$region0: #{visual_adapter_forward.1}
  #allocation0 [shape = 'u32[]', space=smem, size = 0x4, offset = 0x4, fixed_abs, tag = 'smem constant byte address 0x4 - core index']
  #allocation1 [shape = 'u32[144,128]{1,0:T(1,128)}', space=vmem, size = 0x12000, scoped, tag = 'internal scratch']
  #allocation2 [shape = 'f32[32,32]{1,0:T(8,128)}', space=vmem, size = 0x4000, scoped, tag = 'scratch operand']
  #allocation3 [shape = 'f32[1]{0:T(128)S(6)}', space=smem, size = 0x200, scoped, tag = 'scoped memory for visual_adapter_forward.1']
  %s0 = inlined_call_operand.<no memory space> [shape: f32[1], index: 0, kind: input, shape index: {}]
  %s1 = inlined_call_operand.vmem [shape: f32[2,32,16], index: 1, kind: input, shape index: {}]
  %s2 = inlined_call_operand.vmem [shape: f32[2,32,8], index: 2, kind: input, shape index: {}]
  %s3 = inlined_call_operand.vmem [shape: f32[4,32], index: 3, kind: input, shape index: {}]
  %s4 = inlined_call_operand.vmem [shape: bf16[32,8], index: 4, kind: input, shape index: {}]
  %s5 = inlined_call_operand.vmem [shape: f32[1,8], index: 5, kind: input, shape index: {}]
  %s6 = inlined_call_operand.vmem [shape: bf16[8,32], index: 6, kind: input, shape index: {}]
  %s7 = inlined_call_operand.vmem [shape: f32[1,32], index: 7, kind: input, shape index: {}]
  %s8 = inlined_call_operand.vmem [shape: f32[2,32], index: 8, kind: input, shape index: {}]
  %s9 = inlined_call_operand.vmem [shape: f32[2,32], index: 9, kind: input, shape index: {}]
  %s10 = inlined_call_operand.hbm [shape: f32[32,32], index: 10, kind: output, shape index: {}]
  %s11 = sld [smem:[#allocation0]]
  $region50: #{visual_adapter_forward.1} parent=0
    _
  %s13 = ssub.s32 1, %s11
  %s14 = scalar_select 0, %s13, %s11
  %15 = sst [smem:[#allocation3]] %s0
  $region1: #{visual_adapter_forward.1} parent=0
    #allocation4 [shape = 'u8[16384]{0}', space=vmem, size = 0x4000, scoped, tag = 'output window, operand 0, single buffered']
    #allocation5 [shape = 's32[1]{0}', space=sflag, size = 0x4, scoped, tag = 'scoped memory for visual_adapter_forward.1']
    %16 = vsyncpa [#allocation5], 0
    // Predicated region
    $region2: #{visual_adapter_forward.1} parent=1 // pred_check
      _
    $region3: #{visual_adapter_forward.1} parent=1 // pred_check_branch
      %18 = sbr.rel (0) target = $region5
    $region4: #{visual_adapter_forward.1} parent=1 // pred_region
      _
    $region5: #{visual_adapter_forward.1} parent=1 // pred_fallthru
      _
    // Predicated region
    $region6: #{visual_adapter_forward.1} parent=1 // pred_check
      _
    $region7: #{visual_adapter_forward.1} parent=1 // pred_check_branch
      %20 = sbr.rel (0) target = $region9
    $region8: #{visual_adapter_forward.1} parent=1 // pred_region
      _
    $region9: #{visual_adapter_forward.1} parent=1 // pred_fallthru
      _
    // Predicated region
    $region10: #{visual_adapter_forward.1} parent=1 // pred_check
      _
    $region11: #{visual_adapter_forward.1} parent=1 // pred_check_branch
      %22 = sbr.rel (0) target = $region13
    $region12: #{visual_adapter_forward.1} parent=1 // pred_region
      _
    $region13: #{visual_adapter_forward.1} parent=1 // pred_fallthru
      _
    // Predicated region
    $region14: #{visual_adapter_forward.1} parent=1 // pred_check
      _
    $region15: #{visual_adapter_forward.1} parent=1 // pred_check_branch
      %24 = sbr.rel (0) target = $region17
    $region16: #{visual_adapter_forward.1} parent=1 // pred_region
      _
    $region17: #{visual_adapter_forward.1} parent=1 // pred_fallthru
      _
    // Predicated region
    $region18: #{visual_adapter_forward.1} parent=1 // pred_check
      _
    $region19: #{visual_adapter_forward.1} parent=1 // pred_check_branch
      %26 = sbr.rel (0) target = $region21
    $region20: #{visual_adapter_forward.1} parent=1 // pred_region
      _
    $region21: #{visual_adapter_forward.1} parent=1 // pred_fallthru
      _
    // Predicated region
    $region22: #{visual_adapter_forward.1} parent=1 // pred_check
      _
    $region23: #{visual_adapter_forward.1} parent=1 // pred_check_branch
      %28 = sbr.rel (0) target = $region25
    $region24: #{visual_adapter_forward.1} parent=1 // pred_region
      _
    $region25: #{visual_adapter_forward.1} parent=1 // pred_fallthru
      _
    // Predicated region
    $region26: #{visual_adapter_forward.1} parent=1 // pred_check
      _
    $region27: #{visual_adapter_forward.1} parent=1 // pred_check_branch
      %30 = sbr.rel (0) target = $region29
    $region28: #{visual_adapter_forward.1} parent=1 // pred_region
      _
    $region29: #{visual_adapter_forward.1} parent=1 // pred_fallthru
      _
    // Predicated region
    $region30: #{visual_adapter_forward.1} parent=1 // pred_check
      _
    $region31: #{visual_adapter_forward.1} parent=1 // pred_check_branch
      %32 = sbr.rel (0) target = $region33
    $region32: #{visual_adapter_forward.1} parent=1 // pred_region
      _
    $region33: #{visual_adapter_forward.1} parent=1 // pred_fallthru
      _
    // Predicated region
    $region34: #{visual_adapter_forward.1} parent=1 // pred_check
      _
    $region35: #{visual_adapter_forward.1} parent=1 // pred_check_branch
      %34 = sbr.rel (0) target = $region37
    $region36: #{visual_adapter_forward.1} parent=1 // pred_region
      _
    $region37: #{visual_adapter_forward.1} parent=1 // pred_fallthru
      _
    // Predicated region
    $region38: #{visual_adapter_forward.1} parent=1 // pred_check
      _
    $region39: #{visual_adapter_forward.1} parent=1 // pred_check_branch
      %36 = sbr.rel (0) target = $region41
    $region40: #{visual_adapter_forward.1} parent=1 // pred_region
      _
    $region41: #{visual_adapter_forward.1} parent=1 // pred_fallthru
      _
    %s38 = sld [smem:[#allocation3]]
    %v39 = vld [vmem:[%s3] sm:$0xf]
    %v40 = vpack.c.bf16 %v39, %v39
    %v41 = vld [vmem:[%s2] sm:$0xff]
    %v42 = vld [vmem:[%s2 + $0x8] sm:$0xff]
    %v43 = vld [vmem:[%s2 + $0x10] sm:$0xff]
    %v44 = vld [vmem:[%s2 + $0x18] sm:$0xff]
    %v45 = vpack.c.bf16 %v42, %v41
    %v46 = vpack.c.bf16 %v44, %v43
    %vm47 = vcmask 261120
    %v49 = vsel %vm47, %v40, 0
    %51 = vmatprep.subr.bf16.mxu0 0
    %52 = vmatpush1.bf16.msra.mxu0 %v45
    %53 = vmatprep.subr.bf16.mxu0 0
    %54 = vmatpush1.bf16.msra.mxu0 %v46
    %55 = vmatprep.subr.bf16.mxu0 0
    %56 = vmatpush1.bf16.msra.mxu0 0
    %57 = vmatprep.subr.bf16.mxu0 0
    %58 = vmatpush1.bf16.msra.mxu0 0
    %59 = vmatprep.subr.bf16.mxu0 0
    %60 = vmatpush1.bf16.msra.mxu0 0
    %61 = vmatprep.subr.bf16.mxu0 0
    %62 = vmatpush1.bf16.msra.mxu0 0
    %63 = vmatprep.subr.bf16.mxu0 0
    %64 = vmatpush1.bf16.msra.mxu0 0
    %65 = vmatprep.subr.bf16.mxu0 0
    %66 = vmatpush1.bf16.msra.mxu0 0
    %67 = vmatprep.subr.bf16.mxu0 0
    %68 = vmatpush1.bf16.msra.mxu0 0
    %69 = vmatprep.subr.bf16.mxu0 0
    %70 = vmatpush1.bf16.msra.mxu0 0
    %71 = vmatprep.subr.bf16.mxu0 0
    %72 = vmatpush1.bf16.msra.mxu0 0
    %73 = vmatprep.subr.bf16.mxu0 0
    %74 = vmatpush1.bf16.msra.mxu0 0
    %75 = vmatprep.subr.bf16.mxu0 0
    %76 = vmatpush1.bf16.msra.mxu0 0
    %77 = vmatprep.subr.bf16.mxu0 0
    %78 = vmatpush1.bf16.msra.mxu0 0
    %79 = vmatprep.subr.bf16.mxu0 0
    %80 = vmatpush1.bf16.msra.mxu0 0
    %81 = vmatprep.subr.bf16.mxu0 0
    %82 = vmatpush1.bf16.msra.mxu0 0
    %83 = vmatprep.mubr.bf16.mxu0 0
    %84 = vmatmul.mubr.bf16.gmra.mrb[0].mxu0 %v49
    %v85 = vpop.f32.mrb[0].mxu0
    %v86 = vadd.f32 0.0, %v85
    %v87 = vpop.f32.mrb[0].mxu0
    %v88 = vpop.f32.mrb[0].mxu0
    %v89 = vpop.f32.mrb[0].mxu0
    %90 = vdwg.mxu0
    %vm91 = vcmask 60416
    %v92 = vsel %vm91, %v86, -inf
    %93 = vmax.xlane.f32.xlu0 %v92
    %v94 = vpop.xlane.xlu0 %93
    %v95 = vsub.f32 %v86, %v94
    %v96 = vmul.f32 %v95, 1.442695
    %v97 = vpow.pop %v96
    %v98 = vsel %vm91, %v97, 0.0
    %99 = vadd.xlane.f32.xlu0 %v98
    %v100 = vpop.xlane.xlu0 %99
    %v101 = vrcp.pop %v100
    %v102 = vmul.f32 %v97, %v101
    %v103 = vpack.c.bf16 %v102, %v102
    %vm104 = vcmask 64512
    %v106 = vsel %vm104, %v103, 0
    %v109 = vsel %vm104, %v45, 0
    %v112 = vsel %vm104, %v46, 0
    %114 = vmatprep.subr.bf16.mxu0 0
    %115 = vmatpush1.bf16.xpose.msra.mxu0 %v109
    %116 = vmatprep.subr.bf16.mxu0 0
    %117 = vmatpush1.bf16.xpose.msra.mxu0 %v112
    %118 = vmatprep.subr.bf16.mxu0 0
    %119 = vmatpush1.bf16.xpose.msra.mxu0 0
    %120 = vmatprep.subr.bf16.mxu0 0
    %121 = vmatpush1.bf16.xpose.msra.mxu0 0
    %122 = vmatprep.subr.bf16.mxu0 0
    %123 = vmatpush1.bf16.xpose.msra.mxu0 0
    %124 = vmatprep.subr.bf16.mxu0 0
    %125 = vmatpush1.bf16.xpose.msra.mxu0 0
    %126 = vmatprep.subr.bf16.mxu0 0
    %127 = vmatpush1.bf16.xpose.msra.mxu0 0
    %128 = vmatprep.subr.bf16.mxu0 0
    %129 = vmatpush1.bf16.xpose.msra.mxu0 0
    %130 = vmatprep.subr.bf16.mxu0 0
    %131 = vmatpush1.bf16.xpose.msra.mxu0 0
    %132 = vmatprep.subr.bf16.mxu0 0
    %133 = vmatpush1.bf16.xpose.msra.mxu0 0
    %134 = vmatprep.subr.bf16.mxu0 0
    %135 = vmatpush1.bf16.xpose.msra.mxu0 0
    %136 = vmatprep.subr.bf16.mxu0 0
    %137 = vmatpush1.bf16.xpose.msra.mxu0 0
    %138 = vmatprep.subr.bf16.mxu0 0
    %139 = vmatpush1.bf16.xpose.msra.mxu0 0
    %140 = vmatprep.subr.bf16.mxu0 0
    %141 = vmatpush1.bf16.xpose.msra.mxu0 0
    %142 = vmatprep.subr.bf16.mxu0 0
    %143 = vmatpush1.bf16.xpose.msra.mxu0 0
    %144 = vmatprep.subr.bf16.mxu0 0
    %145 = vmatpush1.bf16.xpose.msra.mxu0 0
    %146 = vmatprep.mubr.bf16.mxu0 0
    %147 = vmatmul.mubr.bf16.gmra.mrb[0].mxu0 %v106
    %v148 = vpop.f32.mrb[0].mxu0
    %v149 = vadd.f32 0.0, %v148
    %v150 = vpop.f32.mrb[0].mxu0
    %v151 = vpop.f32.mrb[0].mxu0
    %v152 = vpop.f32.mrb[0].mxu0
    %153 = vdwg.mxu0
    %v154 = vadd.f32 %v39, %v149
    %v155 = vpack.c.bf16 %v154, %v154
    %v156 = vld [vmem:[%s1] sm:$0xff]
    %v157 = vld [vmem:[%s1 + $0x8] sm:$0xff]
    %v158 = vld [vmem:[%s1 + $0x10] sm:$0xff]
    %v159 = vld [vmem:[%s1 + $0x18] sm:$0xff]
    %160 = vxpose.xlu0.b32.start [1/16] %v156, 128
    %161 = vxpose.xlu0.b32.cont [2/16] %v157, 128
    %162 = vxpose.xlu0.b32.cont [3/16] %v158, 128
    %163 = vxpose.xlu0.b32.cont [4/16] %v159, 128
    %164 = vxpose.xlu0.b32.cont [5/16] 0.0, 128
    %165 = vxpose.xlu0.b32.cont [6/16] 0.0, 128
    %166 = vxpose.xlu0.b32.cont [7/16] 0.0, 128
    %167 = vxpose.xlu0.b32.cont [8/16] 0.0, 128
    %168 = vxpose.xlu0.b32.cont [9/16] 0.0, 128
    %169 = vxpose.xlu0.b32.cont [10/16] 0.0, 128
    %170 = vxpose.xlu0.b32.cont [11/16] 0.0, 128
    %171 = vxpose.xlu0.b32.cont [12/16] 0.0, 128
    %172 = vxpose.xlu0.b32.cont [13/16] 0.0, 128
    %173 = vxpose.xlu0.b32.cont [14/16] 0.0, 128
    %174 = vxpose.xlu0.b32.cont [15/16] 0.0, 128
    %175 = vxpose.xlu0.b32.end [16/16] 0.0, 128
    %v176 = vpop.trf.xlu0
    %v177 = vpop.trf.xlu0
    %v178 = vpop.trf.xlu0
    %v179 = vpop.trf.xlu0
    %v180 = vpop.trf.xlu0
    %v181 = vpop.trf.xlu0
    %v182 = vpop.trf.xlu0
    %v183 = vpop.trf.xlu0
    %v184 = vpop.trf.xlu0
    %v185 = vpop.trf.xlu0
    %v186 = vpop.trf.xlu0
    %v187 = vpop.trf.xlu0
    %v188 = vpop.trf.xlu0
    %v189 = vpop.trf.xlu0
    %v190 = vpop.trf.xlu0
    %v191 = vpop.trf.xlu0
    %v192 = vpack.c.bf16 %v177, %v176
    %v194 = vsel %vm47, %v192, 0
    %v197 = vsel %vm47, %v155, 0
    %199 = vmatprep.subr.bf16.mxu0 0
    %200 = vmatpush1.bf16.xpose.msra.mxu0 %v197
    %201 = vmatprep.subr.bf16.mxu0 0
    %202 = vmatpush1.bf16.xpose.msra.mxu0 0
    %203 = vmatprep.subr.bf16.mxu0 0
    %204 = vmatpush1.bf16.xpose.msra.mxu0 0
    %205 = vmatprep.subr.bf16.mxu0 0
    %206 = vmatpush1.bf16.xpose.msra.mxu0 0
    %207 = vmatprep.subr.bf16.mxu0 0
    %208 = vmatpush1.bf16.xpose.msra.mxu0 0
    %209 = vmatprep.subr.bf16.mxu0 0
    %210 = vmatpush1.bf16.xpose.msra.mxu0 0
    %211 = vmatprep.subr.bf16.mxu0 0
    %212 = vmatpush1.bf16.xpose.msra.mxu0 0
    %213 = vmatprep.subr.bf16.mxu0 0
    %214 = vmatpush1.bf16.xpose.msra.mxu0 0
    %215 = vmatprep.subr.bf16.mxu0 0
    %216 = vmatpush1.bf16.xpose.msra.mxu0 0
    %217 = vmatprep.subr.bf16.mxu0 0
    %218 = vmatpush1.bf16.xpose.msra.mxu0 0
    %219 = vmatprep.subr.bf16.mxu0 0
    %220 = vmatpush1.bf16.xpose.msra.mxu0 0
    %221 = vmatprep.subr.bf16.mxu0 0
    %222 = vmatpush1.bf16.xpose.msra.mxu0 0
    %223 = vmatprep.subr.bf16.mxu0 0
    %224 = vmatpush1.bf16.xpose.msra.mxu0 0
    %225 = vmatprep.subr.bf16.mxu0 0
    %226 = vmatpush1.bf16.xpose.msra.mxu0 0
    %227 = vmatprep.subr.bf16.mxu0 0
    %228 = vmatpush1.bf16.xpose.msra.mxu0 0
    %229 = vmatprep.subr.bf16.mxu0 0
    %230 = vmatpush1.bf16.xpose.msra.mxu0 0
    %231 = vmatprep.mubr.bf16.mxu0 0
    %232 = vmatmul.mubr.bf16.gmra.mrb[0].mxu0 %v194
    %v233 = vpop.f32.mrb[0].mxu0
    %v234 = vadd.f32 0.0, %v233
    %v235 = vpop.f32.mrb[0].mxu0
    %v236 = vpop.f32.mrb[0].mxu0
    %v237 = vadd.f32 0.0, %v236
    %v238 = vpop.f32.mrb[0].mxu0
    %239 = vdwg.mxu0
    %vm240 = vcmask 31744
    %v241 = vsel %vm240, %v234, -inf
    %242 = vmax.xlane.f32.xlu0 %v241
    %v243 = vpop.xlane.xlu0 %242
    %v244 = vsel %vm240, %v237, -inf
    %245 = vmax.xlane.f32.xlu0 %v244
    %v246 = vpop.xlane.xlu0 %245
    %v247 = vsub.f32 %v234, %v243
    %v248 = vsub.f32 %v237, %v246
    %v249 = vmul.f32 %v247, 1.442695
    %v250 = vpow.pop %v249
    %v251 = vmul.f32 %v248, 1.442695
    %v252 = vpow.pop %v251
    %v253 = vsel %vm240, %v250, 0.0
    %254 = vadd.xlane.f32.xlu0 %v253
    %v255 = vpop.xlane.xlu0 %254
    %v256 = vsel %vm240, %v252, 0.0
    %257 = vadd.xlane.f32.xlu0 %v256
    %v258 = vpop.xlane.xlu0 %257
    %v259 = vrcp.pop %v255
    %v260 = vmul.f32 %v250, %v259
    %v261 = vrcp.pop %v258
    %v262 = vmul.f32 %v252, %v261
    %v263 = vpack.c.bf16 %v262, %v260
    %v265 = vsel %vm240, %v263, 0
    %vm267 = vcmask 1041408
    %v268 = vsel %vm267, %v155, 0
    %270 = vmatprep.subr.bf16.mxu0 0
    %271 = vmatpush1.bf16.msra.mxu0 %v268
    %272 = vmatprep.subr.bf16.mxu0 0
    %273 = vmatpush1.bf16.msra.mxu0 0
    %274 = vmatprep.subr.bf16.mxu0 0
    %275 = vmatpush1.bf16.msra.mxu0 0
    %276 = vmatprep.subr.bf16.mxu0 0
    %277 = vmatpush1.bf16.msra.mxu0 0
    %278 = vmatprep.subr.bf16.mxu0 0
    %279 = vmatpush1.bf16.msra.mxu0 0
    %280 = vmatprep.subr.bf16.mxu0 0
    %281 = vmatpush1.bf16.msra.mxu0 0
    %282 = vmatprep.subr.bf16.mxu0 0
    %283 = vmatpush1.bf16.msra.mxu0 0
    %284 = vmatprep.subr.bf16.mxu0 0
    %285 = vmatpush1.bf16.msra.mxu0 0
    %286 = vmatprep.subr.bf16.mxu0 0
    %287 = vmatpush1.bf16.msra.mxu0 0
    %288 = vmatprep.subr.bf16.mxu0 0
    %289 = vmatpush1.bf16.msra.mxu0 0
    %290 = vmatprep.subr.bf16.mxu0 0
    %291 = vmatpush1.bf16.msra.mxu0 0
    %292 = vmatprep.subr.bf16.mxu0 0
    %293 = vmatpush1.bf16.msra.mxu0 0
    %294 = vmatprep.subr.bf16.mxu0 0
    %295 = vmatpush1.bf16.msra.mxu0 0
    %296 = vmatprep.subr.bf16.mxu0 0
    %297 = vmatpush1.bf16.msra.mxu0 0
    %298 = vmatprep.subr.bf16.mxu0 0
    %299 = vmatpush1.bf16.msra.mxu0 0
    %300 = vmatprep.subr.bf16.mxu0 0
    %301 = vmatpush1.bf16.msra.mxu0 0
    %302 = vmatprep.mubr.bf16.mxu0 0
    %303 = vmatmul.mubr.bf16.gmra.mrb[0].mxu0 %v265
    %v304 = vpop.f32.mrb[0].mxu0
    %v305 = vadd.f32 0.0, %v304
    %v306 = vpop.f32.mrb[0].mxu0
    %v307 = vpop.f32.mrb[0].mxu0
    %v308 = vadd.f32 0.0, %v307
    %v309 = vpop.f32.mrb[0].mxu0
    %310 = vdwg.mxu0
    %v311 = vstv %s38
    %v312 = vmul.f32 %v311, %v305
    %v313 = vmul.f32 %v311, %v308
    %v314 = vadd.f32 %v176, %v312
    %v315 = vadd.f32 %v177, %v313
    %316 = vst.msk [vmem:[#allocation2] sm:$0xff] %vm47, %v314
    %317 = vst.msk [vmem:[#allocation2 + $0x8] sm:$0xff] %vm47, %v315
    %s318 = scalar_lea.vmem %s2, 32
    %v319 = vld [vmem:[%s318] sm:$0xff]
    %v320 = vld [vmem:[%s318 + $0x8] sm:$0xff]
    %v321 = vld [vmem:[%s318 + $0x10] sm:$0xff]
    %v322 = vld [vmem:[%s318 + $0x18] sm:$0xff]
    %v323 = vpack.c.bf16 %v320, %v319
    %v324 = vpack.c.bf16 %v322, %v321
    %325 = vmatprep.subr.bf16.mxu0 0
    %326 = vmatpush1.bf16.msra.mxu0 %v323
    %327 = vmatprep.subr.bf16.mxu0 0
    %328 = vmatpush1.bf16.msra.mxu0 %v324
    %329 = vmatprep.subr.bf16.mxu0 0
    %330 = vmatpush1.bf16.msra.mxu0 0
    %331 = vmatprep.subr.bf16.mxu0 0
    %332 = vmatpush1.bf16.msra.mxu0 0
    %333 = vmatprep.subr.bf16.mxu0 0
    %334 = vmatpush1.bf16.msra.mxu0 0
    %335 = vmatprep.subr.bf16.mxu0 0
    %336 = vmatpush1.bf16.msra.mxu0 0
    %337 = vmatprep.subr.bf16.mxu0 0
    %338 = vmatpush1.bf16.msra.mxu0 0
    %339 = vmatprep.subr.bf16.mxu0 0
    %340 = vmatpush1.bf16.msra.mxu0 0
    %341 = vmatprep.subr.bf16.mxu0 0
    %342 = vmatpush1.bf16.msra.mxu0 0
    %343 = vmatprep.subr.bf16.mxu0 0
    %344 = vmatpush1.bf16.msra.mxu0 0
    %345 = vmatprep.subr.bf16.mxu0 0
    %346 = vmatpush1.bf16.msra.mxu0 0
    %347 = vmatprep.subr.bf16.mxu0 0
    %348 = vmatpush1.bf16.msra.mxu0 0
    %349 = vmatprep.subr.bf16.mxu0 0
    %350 = vmatpush1.bf16.msra.mxu0 0
    %351 = vmatprep.subr.bf16.mxu0 0
    %352 = vmatpush1.bf16.msra.mxu0 0
    %353 = vmatprep.subr.bf16.mxu0 0
    %354 = vmatpush1.bf16.msra.mxu0 0
    %355 = vmatprep.subr.bf16.mxu0 0
    %356 = vmatpush1.bf16.msra.mxu0 0
    %357 = vmatprep.mubr.bf16.mxu0 0
    %358 = vmatmul.mubr.bf16.gmra.mrb[0].mxu0 %v49
    %v359 = vpop.f32.mrb[0].mxu0
    %v360 = vadd.f32 0.0, %v359
    %v361 = vpop.f32.mrb[0].mxu0
    %v362 = vpop.f32.mrb[0].mxu0
    %v363 = vpop.f32.mrb[0].mxu0
    %364 = vdwg.mxu0
    %v365 = vsel %vm91, %v360, -inf
    %366 = vmax.xlane.f32.xlu0 %v365
    %v367 = vpop.xlane.xlu0 %366
    %v368 = vsub.f32 %v360, %v367
    %v369 = vmul.f32 %v368, 1.442695
    %v370 = vpow.pop %v369
    %v371 = vsel %vm91, %v370, 0.0
    %372 = vadd.xlane.f32.xlu0 %v371
    %v373 = vpop.xlane.xlu0 %372
    %v374 = vrcp.pop %v373
    %v375 = vmul.f32 %v370, %v374
    %v376 = vpack.c.bf16 %v375, %v375
    %v378 = vsel %vm104, %v376, 0
    %v381 = vsel %vm104, %v323, 0
    %v384 = vsel %vm104, %v324, 0
    %386 = vmatprep.subr.bf16.mxu0 0
    %387 = vmatpush1.bf16.xpose.msra.mxu0 %v381
    %388 = vmatprep.subr.bf16.mxu0 0
    %389 = vmatpush1.bf16.xpose.msra.mxu0 %v384
    %390 = vmatprep.subr.bf16.mxu0 0
    %391 = vmatpush1.bf16.xpose.msra.mxu0 0
    %392 = vmatprep.subr.bf16.mxu0 0
    %393 = vmatpush1.bf16.xpose.msra.mxu0 0
    %394 = vmatprep.subr.bf16.mxu0 0
    %395 = vmatpush1.bf16.xpose.msra.mxu0 0
    %396 = vmatprep.subr.bf16.mxu0 0
    %397 = vmatpush1.bf16.xpose.msra.mxu0 0
    %398 = vmatprep.subr.bf16.mxu0 0
    %399 = vmatpush1.bf16.xpose.msra.mxu0 0
    %400 = vmatprep.subr.bf16.mxu0 0
    %401 = vmatpush1.bf16.xpose.msra.mxu0 0
    %402 = vmatprep.subr.bf16.mxu0 0
    %403 = vmatpush1.bf16.xpose.msra.mxu0 0
    %404 = vmatprep.subr.bf16.mxu0 0
    %405 = vmatpush1.bf16.xpose.msra.mxu0 0
    %406 = vmatprep.subr.bf16.mxu0 0
    %407 = vmatpush1.bf16.xpose.msra.mxu0 0
    %408 = vmatprep.subr.bf16.mxu0 0
    %409 = vmatpush1.bf16.xpose.msra.mxu0 0
    %410 = vmatprep.subr.bf16.mxu0 0
    %411 = vmatpush1.bf16.xpose.msra.mxu0 0
    %412 = vmatprep.subr.bf16.mxu0 0
    %413 = vmatpush1.bf16.xpose.msra.mxu0 0
    %414 = vmatprep.subr.bf16.mxu0 0
    %415 = vmatpush1.bf16.xpose.msra.mxu0 0
    %416 = vmatprep.subr.bf16.mxu0 0
    %417 = vmatpush1.bf16.xpose.msra.mxu0 0
    %418 = vmatprep.mubr.bf16.mxu0 0
    %419 = vmatmul.mubr.bf16.gmra.mrb[0].mxu0 %v378
    %v420 = vpop.f32.mrb[0].mxu0
    %v421 = vadd.f32 0.0, %v420
    %v422 = vpop.f32.mrb[0].mxu0
    %v423 = vpop.f32.mrb[0].mxu0
    %v424 = vpop.f32.mrb[0].mxu0
    %425 = vdwg.mxu0
    %v426 = vadd.f32 %v39, %v421
    %v427 = vpack.c.bf16 %v426, %v426
    %s428 = scalar_lea.vmem %s1, 32
    %v429 = vld [vmem:[%s428] sm:$0xff]
    %v430 = vld [vmem:[%s428 + $0x8] sm:$0xff]
    %v431 = vld [vmem:[%s428 + $0x10] sm:$0xff]
    %v432 = vld [vmem:[%s428 + $0x18] sm:$0xff]
    %433 = vxpose.xlu0.b32.start [1/16] %v429, 128
    %434 = vxpose.xlu0.b32.cont [2/16] %v430, 128
    %435 = vxpose.xlu0.b32.cont [3/16] %v431, 128
    %436 = vxpose.xlu0.b32.cont [4/16] %v432, 128
    %437 = vxpose.xlu0.b32.cont [5/16] 0.0, 128
    %438 = vxpose.xlu0.b32.cont [6/16] 0.0, 128
    %439 = vxpose.xlu0.b32.cont [7/16] 0.0, 128
    %440 = vxpose.xlu0.b32.cont [8/16] 0.0, 128
    %441 = vxpose.xlu0.b32.cont [9/16] 0.0, 128
    %442 = vxpose.xlu0.b32.cont [10/16] 0.0, 128
    %443 = vxpose.xlu0.b32.cont [11/16] 0.0, 128
    %444 = vxpose.xlu0.b32.cont [12/16] 0.0, 128
    %445 = vxpose.xlu0.b32.cont [13/16] 0.0, 128
    %446 = vxpose.xlu0.b32.cont [14/16] 0.0, 128
    %447 = vxpose.xlu0.b32.cont [15/16] 0.0, 128
    %448 = vxpose.xlu0.b32.end [16/16] 0.0, 128
    %v449 = vpop.trf.xlu0
    %v450 = vpop.trf.xlu0
    %v451 = vpop.trf.xlu0
    %v452 = vpop.trf.xlu0
    %v453 = vpop.trf.xlu0
    %v454 = vpop.trf.xlu0
    %v455 = vpop.trf.xlu0
    %v456 = vpop.trf.xlu0
    %v457 = vpop.trf.xlu0
    %v458 = vpop.trf.xlu0
    %v459 = vpop.trf.xlu0
    %v460 = vpop.trf.xlu0
    %v461 = vpop.trf.xlu0
    %v462 = vpop.trf.xlu0
    %v463 = vpop.trf.xlu0
    %v464 = vpop.trf.xlu0
    %v465 = vpack.c.bf16 %v450, %v449
    %v467 = vsel %vm47, %v465, 0
    %v470 = vsel %vm47, %v427, 0
    %472 = vmatprep.subr.bf16.mxu0 0
    %473 = vmatpush1.bf16.xpose.msra.mxu0 %v470
    %474 = vmatprep.subr.bf16.mxu0 0
    %475 = vmatpush1.bf16.xpose.msra.mxu0 0
    %476 = vmatprep.subr.bf16.mxu0 0
    %477 = vmatpush1.bf16.xpose.msra.mxu0 0
    %478 = vmatprep.subr.bf16.mxu0 0
    %479 = vmatpush1.bf16.xpose.msra.mxu0 0
    %480 = vmatprep.subr.bf16.mxu0 0
    %481 = vmatpush1.bf16.xpose.msra.mxu0 0
    %482 = vmatprep.subr.bf16.mxu0 0
    %483 = vmatpush1.bf16.xpose.msra.mxu0 0
    %484 = vmatprep.subr.bf16.mxu0 0
    %485 = vmatpush1.bf16.xpose.msra.mxu0 0
    %486 = vmatprep.subr.bf16.mxu0 0
    %487 = vmatpush1.bf16.xpose.msra.mxu0 0
    %488 = vmatprep.subr.bf16.mxu0 0
    %489 = vmatpush1.bf16.xpose.msra.mxu0 0
    %490 = vmatprep.subr.bf16.mxu0 0
    %491 = vmatpush1.bf16.xpose.msra.mxu0 0
    %492 = vmatprep.subr.bf16.mxu0 0
    %493 = vmatpush1.bf16.xpose.msra.mxu0 0
    %494 = vmatprep.subr.bf16.mxu0 0
    %495 = vmatpush1.bf16.xpose.msra.mxu0 0
    %496 = vmatprep.subr.bf16.mxu0 0
    %497 = vmatpush1.bf16.xpose.msra.mxu0 0
    %498 = vmatprep.subr.bf16.mxu0 0
    %499 = vmatpush1.bf16.xpose.msra.mxu0 0
    %500 = vmatprep.subr.bf16.mxu0 0
    %501 = vmatpush1.bf16.xpose.msra.mxu0 0
    %502 = vmatprep.subr.bf16.mxu0 0
    %503 = vmatpush1.bf16.xpose.msra.mxu0 0
    %504 = vmatprep.mubr.bf16.mxu0 0
    %505 = vmatmul.mubr.bf16.gmra.mrb[0].mxu0 %v467
    %v506 = vpop.f32.mrb[0].mxu0
    %v507 = vadd.f32 0.0, %v506
    %v508 = vpop.f32.mrb[0].mxu0
    %v509 = vpop.f32.mrb[0].mxu0
    %v510 = vadd.f32 0.0, %v509
    %v511 = vpop.f32.mrb[0].mxu0
    %512 = vdwg.mxu0
    %v513 = vsel %vm240, %v507, -inf
    %514 = vmax.xlane.f32.xlu0 %v513
    %v515 = vpop.xlane.xlu0 %514
    %v516 = vsel %vm240, %v510, -inf
    %517 = vmax.xlane.f32.xlu0 %v516
    %v518 = vpop.xlane.xlu0 %517
    %v519 = vsub.f32 %v507, %v515
    %v520 = vsub.f32 %v510, %v518
    %v521 = vmul.f32 %v519, 1.442695
    %v522 = vpow.pop %v521
    %v523 = vmul.f32 %v520, 1.442695
    %v524 = vpow.pop %v523
    %v525 = vsel %vm240, %v522, 0.0
    %526 = vadd.xlane.f32.xlu0 %v525
    %v527 = vpop.xlane.xlu0 %526
    %v528 = vsel %vm240, %v524, 0.0
    %529 = vadd.xlane.f32.xlu0 %v528
    %v530 = vpop.xlane.xlu0 %529
    %v531 = vrcp.pop %v527
    %v532 = vmul.f32 %v522, %v531
    %v533 = vrcp.pop %v530
    %v534 = vmul.f32 %v524, %v533
    %v535 = vpack.c.bf16 %v534, %v532
    %v537 = vsel %vm240, %v535, 0
    %v539 = vsel %vm267, %v427, 0
    %541 = vmatprep.subr.bf16.mxu0 0
    %542 = vmatpush1.bf16.msra.mxu0 %v539
    %543 = vmatprep.subr.bf16.mxu0 0
    %544 = vmatpush1.bf16.msra.mxu0 0
    %545 = vmatprep.subr.bf16.mxu0 0
    %546 = vmatpush1.bf16.msra.mxu0 0
    %547 = vmatprep.subr.bf16.mxu0 0
    %548 = vmatpush1.bf16.msra.mxu0 0
    %549 = vmatprep.subr.bf16.mxu0 0
    %550 = vmatpush1.bf16.msra.mxu0 0
    %551 = vmatprep.subr.bf16.mxu0 0
    %552 = vmatpush1.bf16.msra.mxu0 0
    %553 = vmatprep.subr.bf16.mxu0 0
    %554 = vmatpush1.bf16.msra.mxu0 0
    %555 = vmatprep.subr.bf16.mxu0 0
    %556 = vmatpush1.bf16.msra.mxu0 0
    %557 = vmatprep.subr.bf16.mxu0 0
    %558 = vmatpush1.bf16.msra.mxu0 0
    %559 = vmatprep.subr.bf16.mxu0 0
    %560 = vmatpush1.bf16.msra.mxu0 0
    %561 = vmatprep.subr.bf16.mxu0 0
    %562 = vmatpush1.bf16.msra.mxu0 0
    %563 = vmatprep.subr.bf16.mxu0 0
    %564 = vmatpush1.bf16.msra.mxu0 0
    %565 = vmatprep.subr.bf16.mxu0 0
    %566 = vmatpush1.bf16.msra.mxu0 0
    %567 = vmatprep.subr.bf16.mxu0 0
    %568 = vmatpush1.bf16.msra.mxu0 0
    %569 = vmatprep.subr.bf16.mxu0 0
    %570 = vmatpush1.bf16.msra.mxu0 0
    %571 = vmatprep.subr.bf16.mxu0 0
    %572 = vmatpush1.bf16.msra.mxu0 0
    %573 = vmatprep.mubr.bf16.mxu0 0
    %574 = vmatmul.mubr.bf16.gmra.mrb[0].mxu0 %v537
    %v575 = vpop.f32.mrb[0].mxu0
    %v576 = vadd.f32 0.0, %v575
    %v577 = vpop.f32.mrb[0].mxu0
    %v578 = vpop.f32.mrb[0].mxu0
    %v579 = vadd.f32 0.0, %v578
    %v580 = vpop.f32.mrb[0].mxu0
    %581 = vdwg.mxu0
    %v582 = vmul.f32 %v311, %v576
    %v583 = vmul.f32 %v311, %v579
    %v584 = vadd.f32 %v449, %v582
    %v585 = vadd.f32 %v450, %v583
    %586 = vst.msk [vmem:[#allocation2 + $0x10] sm:$0xff] %vm47, %v584
    %587 = vst.msk [vmem:[#allocation2 + $0x18] sm:$0xff] %vm47, %v585
    %v588 = vld [vmem:[#allocation2] sm:$0xff]
    %v589 = vld [vmem:[#allocation2 + $0x8] sm:$0xff]
    %v590 = vld [vmem:[#allocation2 + $0x10] sm:$0xff]
    %v591 = vld [vmem:[#allocation2 + $0x18] sm:$0xff]
    %v592 = vld [vmem:[%s8] sm:$0x1]
    %v593 = vld [vmem:[%s8 + $0x1] sm:$0x1]
    %v594 = vsel %vm47, %v588, 0.0
    %595 = vadd.xlane.f32.xlu0 %v594
    %v596 = vpop.xlane.xlu0 %595
    %v597 = vsel %vm47, %v589, 0.0
    %598 = vadd.xlane.f32.xlu0 %v597
    %v599 = vpop.xlane.xlu0 %598
    %v600 = vsel %vm47, %v590, 0.0
    %601 = vadd.xlane.f32.xlu0 %v600
    %v602 = vpop.xlane.xlu0 %601
    %v603 = vsel %vm47, %v591, 0.0
    %604 = vadd.xlane.f32.xlu0 %v603
    %v605 = vpop.xlane.xlu0 %604
    %v606 = vrcp.pop 32.0
    %v607 = vmul.f32 %v596, %v606
    %v608 = vmul.f32 %v599, %v606
    %v609 = vmul.f32 %v602, %v606
    %v610 = vmul.f32 %v605, %v606
    %v611 = vmul.f32 %v588, %v588
    %v612 = vmul.f32 %v589, %v589
    %v613 = vmul.f32 %v590, %v590
    %v614 = vmul.f32 %v591, %v591
    %v615 = vsel %vm47, %v611, 0.0
    %616 = vadd.xlane.f32.xlu0 %v615
    %v617 = vpop.xlane.xlu0 %616
    %v618 = vsel %vm47, %v612, 0.0
    %619 = vadd.xlane.f32.xlu0 %v618
    %v620 = vpop.xlane.xlu0 %619
    %v621 = vsel %vm47, %v613, 0.0
    %622 = vadd.xlane.f32.xlu0 %v621
    %v623 = vpop.xlane.xlu0 %622
    %v624 = vsel %vm47, %v614, 0.0
    %625 = vadd.xlane.f32.xlu0 %v624
    %v626 = vpop.xlane.xlu0 %625
    %v627 = vmul.f32 %v617, %v606
    %v628 = vmul.f32 %v620, %v606
    %v629 = vmul.f32 %v623, %v606
    %v630 = vmul.f32 %v626, %v606
    %v631 = vmul.f32 %v607, %v607
    %v632 = vmul.f32 %v608, %v608
    %v633 = vmul.f32 %v609, %v609
    %v634 = vmul.f32 %v610, %v610
    %v635 = vsub.f32 %v627, %v631
    %v636 = vsub.f32 %v628, %v632
    %v637 = vsub.f32 %v629, %v633
    %v638 = vsub.f32 %v630, %v634
    %v639 = vsub.f32 %v588, %v607
    %v640 = vsub.f32 %v589, %v608
    %v641 = vsub.f32 %v590, %v609
    %v642 = vsub.f32 %v591, %v610
    %v643 = vadd.f32 %v635, 1e-05
    %v644 = vadd.f32 %v636, 1e-05
    %v645 = vadd.f32 %v637, 1e-05
    %v646 = vadd.f32 %v638, 1e-05
    %v647 = vrsqrt.pop %v643
    %v648 = vrsqrt.pop %v644
    %v649 = vrsqrt.pop %v645
    %v650 = vrsqrt.pop %v646
    %v651 = vmul.f32 %v639, %v647
    %v652 = vmul.f32 %v640, %v648
    %v653 = vmul.f32 %v641, %v649
    %v654 = vmul.f32 %v642, %v650
    %v655 = vlaneseq
    %v656 = vshrl.u32 %v655, 7
    %v657 = vsub.s32 0, %v656
    %v658 = vrot.slane %v592, %v657
    %v659 = vmul.f32 %v651, %v658
    %v660 = vmul.f32 %v652, %v658
    %v661 = vmul.f32 %v653, %v658
    %v662 = vmul.f32 %v654, %v658
    %v663 = vlaneseq
    %v664 = vshrl.u32 %v663, 7
    %v665 = vsub.s32 0, %v664
    %v666 = vrot.slane %v593, %v665
    %v667 = vadd.f32 %v659, %v666
    %v668 = vadd.f32 %v660, %v666
    %v669 = vadd.f32 %v661, %v666
    %v670 = vadd.f32 %v662, %v666
    %v671 = vpack.c.bf16 %v668, %v667
    %v672 = vpack.c.bf16 %v670, %v669
    %v673 = vld [vmem:[%s4] sm:$0xf]
    %v674 = vld [vmem:[%s4 + $0x4] sm:$0xf]
    %v675 = vld [vmem:[%s4 + $0x8] sm:$0xf]
    %v676 = vld [vmem:[%s4 + $0xc] sm:$0xf]
    %v677 = vld [vmem:[%s5] sm:$0x1]
    %v679 = vlaneseq
    %v680 = vshrl.u32 %v679, 7
    %v681 = vsub.s32 0, %v680
    %v682 = vrot.slane %v677, %v681
    %v688 = vunpack.c.l.b16 %v673
    %v689 = vunpack.c.l.b16 %v674
    %v690 = vunpack.c.l.b16 %v675
    %v691 = vunpack.c.l.b16 %v676
    %v692 = vpack.c.b16 %v689, %v688
    %v693 = vpack.c.b16 %v691, %v690
    %v697 = vsel %vm47, %v671, 0
    %v700 = vsel %vm47, %v672, 0
    %702 = vmatprep.subr.bf16.mxu0 0
    %703 = vmatpush1.bf16.msra.mxu0 %v692
    %704 = vmatprep.subr.bf16.mxu0 0
    %705 = vmatpush1.bf16.msra.mxu0 %v693
    %706 = vmatprep.subr.bf16.mxu0 0
    %707 = vmatpush1.bf16.msra.mxu0 0
    %708 = vmatprep.subr.bf16.mxu0 0
    %709 = vmatpush1.bf16.msra.mxu0 0
    %710 = vmatprep.subr.bf16.mxu0 0
    %711 = vmatpush1.bf16.msra.mxu0 0
    %712 = vmatprep.subr.bf16.mxu0 0
    %713 = vmatpush1.bf16.msra.mxu0 0
    %714 = vmatprep.subr.bf16.mxu0 0
    %715 = vmatpush1.bf16.msra.mxu0 0
    %716 = vmatprep.subr.bf16.mxu0 0
    %717 = vmatpush1.bf16.msra.mxu0 0
    %718 = vmatprep.subr.bf16.mxu0 0
    %719 = vmatpush1.bf16.msra.mxu0 0
    %720 = vmatprep.subr.bf16.mxu0 0
    %721 = vmatpush1.bf16.msra.mxu0 0
    %722 = vmatprep.subr.bf16.mxu0 0
    %723 = vmatpush1.bf16.msra.mxu0 0
    %724 = vmatprep.subr.bf16.mxu0 0
    %725 = vmatpush1.bf16.msra.mxu0 0
    %726 = vmatprep.subr.bf16.mxu0 0
    %727 = vmatpush1.bf16.msra.mxu0 0
    %728 = vmatprep.subr.bf16.mxu0 0
    %729 = vmatpush1.bf16.msra.mxu0 0
    %730 = vmatprep.subr.bf16.mxu0 0
    %731 = vmatpush1.bf16.msra.mxu0 0
    %732 = vmatprep.subr.bf16.mxu0 0
    %733 = vmatpush1.bf16.msra.mxu0 0
    %734 = vmatprep.mubr.bf16.mxu0 0
    %735 = vmatmul.mubr.bf16.gmra.mrb[0].mxu0 %v697
    %v736 = vpop.f32.mrb[0].mxu0
    %v737 = vadd.f32 %v682, %v736
    %v738 = vpop.f32.mrb[0].mxu0
    %v739 = vpop.f32.mrb[0].mxu0
    %v740 = vadd.f32 %v682, %v739
    %v741 = vpop.f32.mrb[0].mxu0
    %742 = vmatprep.mubr.bf16.mxu0 0
    %743 = vmatmul.mubr.bf16.gmra.mrb[0].mxu0 %v700
    %v744 = vpop.f32.mrb[0].mxu0
    %v745 = vadd.f32 %v682, %v744
    %v746 = vpop.f32.mrb[0].mxu0
    %v747 = vpop.f32.mrb[0].mxu0
    %v748 = vadd.f32 %v682, %v747
    %v749 = vpop.f32.mrb[0].mxu0
    %750 = vdwg.mxu0
    %v751 = vmax.f32 %v737, 0.0
    %v752 = vmax.f32 %v740, 0.0
    %v753 = vmax.f32 %v745, 0.0
    %v754 = vmax.f32 %v748, 0.0
    %v755 = vpack.c.bf16 %v752, %v751
    %v756 = vpack.c.bf16 %v754, %v753
    %v757 = vld [vmem:[%s6] sm:$0xf]
    %v758 = vld [vmem:[%s7] sm:$0x1]
    %v760 = vlaneseq
    %v761 = vshrl.u32 %v760, 7
    %v762 = vsub.s32 0, %v761
    %v763 = vrot.slane %v758, %v762
    %v766 = vsel %vm104, %v755, 0
    %v769 = vsel %vm104, %v756, 0
    %vm771 = vcmask 1043456
    %v773 = vsel %vm771, %v757, 0
    %775 = vmatprep.subr.bf16.mxu0 0
    %776 = vmatpush1.bf16.msra.mxu0 %v773
    %777 = vmatprep.subr.bf16.mxu0 0
    %778 = vmatpush1.bf16.msra.mxu0 0
    %779 = vmatprep.subr.bf16.mxu0 0
    %780 = vmatpush1.bf16.msra.mxu0 0
    %781 = vmatprep.subr.bf16.mxu0 0
    %782 = vmatpush1.bf16.msra.mxu0 0
    %783 = vmatprep.subr.bf16.mxu0 0
    %784 = vmatpush1.bf16.msra.mxu0 0
    %785 = vmatprep.subr.bf16.mxu0 0
    %786 = vmatpush1.bf16.msra.mxu0 0
    %787 = vmatprep.subr.bf16.mxu0 0
    %788 = vmatpush1.bf16.msra.mxu0 0
    %789 = vmatprep.subr.bf16.mxu0 0
    %790 = vmatpush1.bf16.msra.mxu0 0
    %791 = vmatprep.subr.bf16.mxu0 0
    %792 = vmatpush1.bf16.msra.mxu0 0
    %793 = vmatprep.subr.bf16.mxu0 0
    %794 = vmatpush1.bf16.msra.mxu0 0
    %795 = vmatprep.subr.bf16.mxu0 0
    %796 = vmatpush1.bf16.msra.mxu0 0
    %797 = vmatprep.subr.bf16.mxu0 0
    %798 = vmatpush1.bf16.msra.mxu0 0
    %799 = vmatprep.subr.bf16.mxu0 0
    %800 = vmatpush1.bf16.msra.mxu0 0
    %801 = vmatprep.subr.bf16.mxu0 0
    %802 = vmatpush1.bf16.msra.mxu0 0
    %803 = vmatprep.subr.bf16.mxu0 0
    %804 = vmatpush1.bf16.msra.mxu0 0
    %805 = vmatprep.subr.bf16.mxu0 0
    %806 = vmatpush1.bf16.msra.mxu0 0
    %807 = vmatprep.mubr.bf16.mxu0 0
    %808 = vmatmul.mubr.bf16.gmra.mrb[0].mxu0 %v766
    %v809 = vpop.f32.mrb[0].mxu0
    %v810 = vadd.f32 %v763, %v809
    %v811 = vpop.f32.mrb[0].mxu0
    %v812 = vpop.f32.mrb[0].mxu0
    %v813 = vadd.f32 %v763, %v812
    %v814 = vpop.f32.mrb[0].mxu0
    %815 = vmatprep.mubr.bf16.mxu0 0
    %816 = vmatmul.mubr.bf16.gmra.mrb[0].mxu0 %v769
    %v817 = vpop.f32.mrb[0].mxu0
    %v818 = vadd.f32 %v763, %v817
    %v819 = vpop.f32.mrb[0].mxu0
    %v820 = vpop.f32.mrb[0].mxu0
    %v821 = vadd.f32 %v763, %v820
    %v822 = vpop.f32.mrb[0].mxu0
    %823 = vdwg.mxu0
    %v824 = vld [vmem:[%s9] sm:$0x1]
    %v825 = vld [vmem:[%s9 + $0x1] sm:$0x1]
    %v826 = vsel %vm47, %v810, 0.0
    %827 = vadd.xlane.f32.xlu0 %v826
    %v828 = vpop.xlane.xlu0 %827
    %v829 = vsel %vm47, %v813, 0.0
    %830 = vadd.xlane.f32.xlu0 %v829
    %v831 = vpop.xlane.xlu0 %830
    %v832 = vsel %vm47, %v818, 0.0
    %833 = vadd.xlane.f32.xlu0 %v832
    %v834 = vpop.xlane.xlu0 %833
    %v835 = vsel %vm47, %v821, 0.0
    %836 = vadd.xlane.f32.xlu0 %v835
    %v837 = vpop.xlane.xlu0 %836
    %v838 = vmul.f32 %v828, %v606
    %v839 = vmul.f32 %v831, %v606
    %v840 = vmul.f32 %v834, %v606
    %v841 = vmul.f32 %v837, %v606
    %v842 = vmul.f32 %v810, %v810
    %v843 = vmul.f32 %v813, %v813
    %v844 = vmul.f32 %v818, %v818
    %v845 = vmul.f32 %v821, %v821
    %v846 = vsel %vm47, %v842, 0.0
    %847 = vadd.xlane.f32.xlu0 %v846
    %v848 = vpop.xlane.xlu0 %847
    %v849 = vsel %vm47, %v843, 0.0
    %850 = vadd.xlane.f32.xlu0 %v849
    %v851 = vpop.xlane.xlu0 %850
    %v852 = vsel %vm47, %v844, 0.0
    %853 = vadd.xlane.f32.xlu0 %v852
    %v854 = vpop.xlane.xlu0 %853
    %v855 = vsel %vm47, %v845, 0.0
    %856 = vadd.xlane.f32.xlu0 %v855
    %v857 = vpop.xlane.xlu0 %856
    %v858 = vmul.f32 %v848, %v606
    %v859 = vmul.f32 %v851, %v606
    %v860 = vmul.f32 %v854, %v606
    %v861 = vmul.f32 %v857, %v606
    %v862 = vmul.f32 %v838, %v838
    %v863 = vmul.f32 %v839, %v839
    %v864 = vmul.f32 %v840, %v840
    %v865 = vmul.f32 %v841, %v841
    %v866 = vsub.f32 %v858, %v862
    %v867 = vsub.f32 %v859, %v863
    %v868 = vsub.f32 %v860, %v864
    %v869 = vsub.f32 %v861, %v865
    %v870 = vsub.f32 %v810, %v838
    %v871 = vsub.f32 %v813, %v839
    %v872 = vsub.f32 %v818, %v840
    %v873 = vsub.f32 %v821, %v841
    %v874 = vadd.f32 %v866, 1e-05
    %v875 = vadd.f32 %v867, 1e-05
    %v876 = vadd.f32 %v868, 1e-05
    %v877 = vadd.f32 %v869, 1e-05
    %v878 = vrsqrt.pop %v874
    %v879 = vrsqrt.pop %v875
    %v880 = vrsqrt.pop %v876
    %v881 = vrsqrt.pop %v877
    %v882 = vmul.f32 %v870, %v878
    %v883 = vmul.f32 %v871, %v879
    %v884 = vmul.f32 %v872, %v880
    %v885 = vmul.f32 %v873, %v881
    %v886 = vlaneseq
    %v887 = vshrl.u32 %v886, 7
    %v888 = vsub.s32 0, %v887
    %v889 = vrot.slane %v824, %v888
    %v890 = vmul.f32 %v882, %v889
    %v891 = vmul.f32 %v883, %v889
    %v892 = vmul.f32 %v884, %v889
    %v893 = vmul.f32 %v885, %v889
    %v894 = vlaneseq
    %v895 = vshrl.u32 %v894, 7
    %v896 = vsub.s32 0, %v895
    %v897 = vrot.slane %v825, %v896
    %v898 = vadd.f32 %v890, %v897
    %v899 = vadd.f32 %v891, %v897
    %v900 = vadd.f32 %v892, %v897
    %v901 = vadd.f32 %v893, %v897
    %902 = vst.msk [vmem:[#allocation4] sm:$0xff] %vm47, %v898
    %903 = vst.msk [vmem:[#allocation4 + $0x8] sm:$0xff] %vm47, %v899
    %904 = vst.msk [vmem:[#allocation4 + $0x10] sm:$0xff] %vm47, %v900
    %905 = vst.msk [vmem:[#allocation4 + $0x18] sm:$0xff] %vm47, %v901
    // Predicated region
    $region42: #{visual_adapter_forward.1} parent=1 // pred_check
      _
    $region43: #{visual_adapter_forward.1} parent=1 // pred_check_branch
      %907 = sbr.rel (0) target = $region45
    $region44: #{visual_adapter_forward.1} parent=1 // pred_region
      %s909 = ssub.s32 512, 512
      %910 = vsyncadd [#allocation5], %s909
      %s911 = sshll.u32 [#allocation4], 4
      %s912 = int_to_ptr.vmem [resolvable:$true] %s911
      %917 = dma.vmem_to_hbm [thread:$0]  %s912, 512, %s10, [#allocation5], 128, 128, 8
    $region45: #{visual_adapter_forward.1} parent=1 // pred_fallthru
      _
    // Predicated region
    $region46: #{visual_adapter_forward.1} parent=1 // pred_check
      _
    $region47: #{visual_adapter_forward.1} parent=1 // pred_check_branch
      %919 = sbr.rel (0) target = $region49
    $region48: #{visual_adapter_forward.1} parent=1 // pred_region
      %920 = dma.done [#allocation5], 512
    $region49: #{visual_adapter_forward.1} parent=1 // pred_fallthru
      _
    %921 = vsyncpa [#allocation5], 1

</llo_original>
